<compile_context>
chip_gen: v6e
topology: v6e:2x2x1
jax: 0.10.0
libtpu: 0.0.40
codegen_flags: <defaults>
</compile_context>

<pallas_src>
import functools

import jax
import jax.numpy as jnp
from jax.experimental import pallas as pl
from jax.experimental.pallas import tpu as pltpu


def _round_up(x, m):
    return ((x + m - 1) // m) * m


def _fused_ffn_kernel(x_ref, w0_ref, ln_ref, w1_ref, b1_ref, o_ref, *,
                      hid, inv_hid, eps, num_subtiles, mxu_dtype):
    """Fused [Linear -> ReLU -> LayerNorm -> Linear -> ReLU] on one row tile."""
    # Grid-invariant operands, hoisted once per tile.
    w0 = w0_ref[...]                       # (in_dim, hid_p)  mxu_dtype
    w1 = w1_ref[...]                       # (hid_p,  out_p)  mxu_dtype
    ln = ln_ref[...]                       # (3, hid_p) f32: bias0 / gamma / beta
    b0, g0, be0 = ln[0:1, :], ln[1:2, :], ln[2:3, :]
    b1 = b1_ref[...]                       # (1, out_p) f32

    hid_p = w0_ref.shape[1]
    real_col = jax.lax.broadcasted_iota(jnp.int32, (1, hid_p), 1) < hid

    tm = x_ref.shape[0]
    ts = tm // num_subtiles
    for s in range(num_subtiles):          # static unroll; scheduler interleaves
        rows = pl.ds(s * ts, ts)
        x = x_ref[rows, :].astype(mxu_dtype)

        # Layer 0: Linear -> ReLU (bf16 MXU operands, f32 accumulation).
        h = jnp.dot(x, w0, preferred_element_type=jnp.float32) + b0
        h = jnp.maximum(h, 0.0)

        # LayerNorm over the *real* hidden width.  Padded hidden columns of h
        # are exactly zero (zero W0 cols / zero bias), so the full-width sum
        # equals the real-width sum; the centered pass masks padded columns so
        # variance is a true sum of squares (no E[x^2]-E[x]^2 cancellation).
        mean = jnp.sum(h, axis=-1, keepdims=True) * inv_hid
        centered = jnp.where(real_col, h - mean, 0.0)
        var = jnp.sum(centered * centered, axis=-1, keepdims=True) * inv_hid
        hn = centered * jax.lax.rsqrt(var + eps) * g0 + be0   # pad cols stay 0

        # Layer 1 (last): Linear -> ReLU, no LayerNorm, dropout = identity.
        y = jnp.dot(hn.astype(mxu_dtype), w1,
                    preferred_element_type=jnp.float32) + b1
        y = jnp.maximum(y, 0.0)

        o_ref[rows, :] = y.astype(o_ref.dtype)


def multilayer_ffn(x, params, *, eps=1e-5, tm_max=512, mxu_dtype=jnp.bfloat16):
    """x: [batch, ..., input_dim] -> [batch, ..., output_dim].

    params: list of two dicts (layer 0 with LN, layer 1 without), each with
    'w' (in_dim, out_dim) and 'b'/'gamma'/'beta' of shape (1, out_dim).
    Set mxu_dtype=jnp.float32 for bit-faithful f32 matmuls (slower on the MXU).
    """
    assert len(params) == 2, "fused kernel covers the num_hidden_layers=1 config"
    p0, p1 = params

    lead = x.shape[:-1]
    x2 = x.reshape(-1, x.shape[-1])
    n, in_dim = x2.shape
    hid = p0["w"].shape[1]
    out_dim = p1["w"].shape[1]

    # Lane-dense padded feature dims for weights / bias / output.  X keeps its
    # real input_dim (full-array block dim) -> no wrapper-side pad copy of X.
    hid_p = _round_up(hid, 128)
    out_p = _round_up(out_dim, 128)

    x_bytes = jnp.dtype(x.dtype).itemsize
    w_bytes = jnp.dtype(mxu_dtype).itemsize
    sub_min = {1: 32, 2: 16, 4: 8}.get(x_bytes, 8)   # dtype-aware sublane tile

    # Row tile selection.
    n_sub = _round_up(max(n, sub_min), sub_min)
    tm = min(tm_max, n_sub)
    if n_sub // tm < 2 and n_sub >= 2 * sub_min:
        # Guarantee >= 2 grid steps so both v7x TensorCores get work
        # (negligible per-step overhead on single-TC v5e/v6e).
        tm = _round_up(pl.cdiv(n_sub, 2), sub_min)

    # Generation-aware VMEM budget (leave headroom for compiler scratch).
    try:
        vmem_cap = int(pltpu.get_tpu_info().vmem_capacity_bytes)
    except Exception:
        vmem_cap = 64 * 1024 * 1024
    vmem_budget = (vmem_cap * 3) // 4      # ~48 MiB on v7x, ~96 MiB on v5e/v6e

    in_l = _round_up(in_dim, 128)          # VMEM lane footprint of the X tile

    def est_bytes(tm_):
        return (2 * tm_ * (in_l + out_p) * x_bytes          # double-buffered X / out
                + (in_l * hid_p + hid_p * out_p) * w_bytes  # single-buffered weights
                + (3 * hid_p + out_p) * 4                   # LN pack + b1
                + 2 * tm_ * hid_p * 4)                      # f32 hidden intermediates

    while est_bytes(tm) > vmem_budget and tm > sub_min:
        tm = max(sub_min, _round_up(tm // 2, sub_min))
    # TODO(synk): if resident W0+W1 alone exceed the budget (huge hidden dims),
    #             a K-tiled weight pipeline would be needed; not implemented.

    n_pad = _round_up(n_sub, tm)
    num_subtiles = 2 if (tm % (2 * sub_min) == 0) else 1

    if n_pad != n:
        x2 = jnp.pad(x2, ((0, n_pad - n), (0, 0)))

    # Weights cast to the MXU dtype once in the wrapper; LN/bias stay f32.
    w0 = jnp.pad(p0["w"], ((0, 0), (0, hid_p - hid))).astype(mxu_dtype)
    w1 = jnp.pad(p1["w"], ((0, hid_p - hid), (0, out_p - out_dim))).astype(mxu_dtype)
    ln_pack = jnp.concatenate(
        [jnp.pad(p0["b"], ((0, 0), (0, hid_p - hid))),
         jnp.pad(p0["gamma"], ((0, 0), (0, hid_p - hid))),
         jnp.pad(p0["beta"], ((0, 0), (0, hid_p - hid)))],
        axis=0).astype(jnp.float32)
    b1 = jnp.pad(p1["b"], ((0, 0), (0, out_p - out_dim))).astype(jnp.float32)

    vmem_limit = int(min(vmem_budget, max(32 * 1024 * 1024, 2 * est_bytes(tm))))

    kernel = functools.partial(
        _fused_ffn_kernel, hid=hid, inv_hid=1.0 / float(hid), eps=eps,
        num_subtiles=num_subtiles, mxu_dtype=mxu_dtype)

    single = pl.Buffered(1)   # grid-invariant operands: no double buffering
    out = pl.pallas_call(
        kernel,
        out_shape=jax.ShapeDtypeStruct((n_pad, out_p), x.dtype),
        grid_spec=pltpu.PrefetchScalarGridSpec(
            num_scalar_prefetch=0,
            grid=(n_pad // tm,),
            in_specs=[
                pl.BlockSpec((tm, in_dim), lambda i: (i, 0)),        # X row tile
                pl.BlockSpec((in_dim, hid_p), lambda i: (0, 0),
                             pipeline_mode=single),                  # W0 (resident)
                pl.BlockSpec((3, hid_p), lambda i: (0, 0),
                             pipeline_mode=single),                  # b0/gamma/beta
                pl.BlockSpec((hid_p, out_p), lambda i: (0, 0),
                             pipeline_mode=single),                  # W1 (resident)
                pl.BlockSpec((1, out_p), lambda i: (0, 0),
                             pipeline_mode=single),                  # b1
            ],
            out_specs=pl.BlockSpec((tm, out_p), lambda i: (i, 0)),
        ),
        compiler_params=pltpu.CompilerParams(
            dimension_semantics=("parallel",),
            vmem_limit_bytes=vmem_limit),
    )(x2, w0, ln_pack, w1, b1)

    return out[:n, :out_dim].reshape(*lead, out_dim)


def xavier_uniform(key, in_dim, out_dim, dtype=jnp.float32):
    # matches nn.init.xavier_uniform_ on a (out_dim, in_dim) weight,
    # returned already transposed to (in_dim, out_dim).
    bound = (6.0 / (in_dim + out_dim)) ** 0.5
    w = jax.random.uniform(key, (out_dim, in_dim), dtype, -bound, bound)
    return w.T


def init_params(key, input_dim, hidden_dim, output_dim):
    k0, k1, k2, k3 = jax.random.split(key, 4)
    params = []
    # layer 0: input_dim -> hidden_dim, with layernorm
    w0 = xavier_uniform(k0, input_dim, hidden_dim)
    b0 = jax.random.uniform(k1, (1, hidden_dim), jnp.float32,
                            -1.0 / input_dim ** 0.5, 1.0 / input_dim ** 0.5)
    params.append(dict(w=w0, b=b0, gamma=jnp.ones((1, hidden_dim), jnp.float32),
                       beta=jnp.zeros((1, hidden_dim), jnp.float32), use_ln=True))
    # layer 1 (last): hidden_dim -> output_dim, no layernorm
    w1 = xavier_uniform(k2, hidden_dim, output_dim)
    b1 = jax.random.uniform(k3, (1, output_dim), jnp.float32,
                            -1.0 / hidden_dim ** 0.5, 1.0 / hidden_dim ** 0.5)
    params.append(dict(w=w1, b=b1, gamma=jnp.ones((1, output_dim), jnp.float32),
                       beta=jnp.zeros((1, output_dim), jnp.float32), use_ln=False))
    return params


def _reference(x, params, eps=1e-5, mxu_dtype=None):
    """Pure-JAX forward. mxu_dtype=None -> exact f32; else mirrors kernel math."""
    out = x
    for p in params:
        a, w = out, p["w"]
        if mxu_dtype is not None:
            a, w = a.astype(mxu_dtype), w.astype(mxu_dtype)
        y = jnp.dot(a, w, preferred_element_type=jnp.float32) + p["b"]
        y = jnp.maximum(y, 0.0)
        if p["use_ln"]:
            mean = jnp.mean(y, axis=-1, keepdims=True)
            c = y - mean
            var = jnp.mean(c * c, axis=-1, keepdims=True)
            y = c * jax.lax.rsqrt(var + eps) * p["gamma"] + p["beta"]
        out = y.astype(x.dtype)
    return out


if __name__ == "__main__":
    batch, seq = 2, 8
    input_dim, hidden_dim, output_dim = 32, 64, 16

    key = jax.random.PRNGKey(0)
    kx, kp = jax.random.split(key)
    x = jax.random.normal(kx, (batch, seq, input_dim), jnp.float32)
    params = init_params(kp, input_dim, hidden_dim, output_dim)

    out = multilayer_ffn(x, params)
    out = jax.block_until_ready(out)

    assert out.shape == (batch, seq, output_dim)
    assert bool(jnp.all(jnp.isfinite(out)))

    # Kernel-math check: reference mirroring the bf16-MXU / f32-accum path.
    ref_mixed = _reference(x, params, mxu_dtype=jnp.bfloat16)
    assert jnp.allclose(out, ref_mixed, atol=2e-3, rtol=2e-3), \
        "mismatch vs mixed-precision reference"

    # Semantic sanity vs the pure-f32 module-equivalent forward.
    ref_f32 = _reference(x, params)
    assert jnp.allclose(out, ref_f32, atol=5e-2, rtol=5e-2), \
        "mismatch vs f32 reference"

    print("KERNEL_OK")
</pallas_src>

<mosaic_0001>
module attributes {stable_mosaic.version = 11 : i64} {
  func.func @_fused_ffn_kernel(%arg0: i32, %arg1: memref<8x32xf32, #tpu.memory_space<vmem>>, %arg2: memref<32x128xbf16, #tpu.memory_space<vmem>>, %arg3: memref<3x128xf32, #tpu.memory_space<vmem>>, %arg4: memref<128x128xbf16, #tpu.memory_space<vmem>>, %arg5: memref<1x128xf32, #tpu.memory_space<vmem>>, %arg6: memref<8x128xf32, #tpu.memory_space<vmem>>) attributes {dimension_semantics = [#tpu.dimension_semantics<parallel>], iteration_bounds = array<i64: 2>, scalar_prefetch = 0 : i64, scratch_operands = 0 : i64, tpu.core_type = #tpu.core_type<tc>, window_params = [{transform_indices = @transform_0, window_bounds = array<i64: 8, 32>}, {pipeline_mode = #tpu.pipeline_mode<synchronous>, transform_indices = @transform_1, window_bounds = array<i64: 32, 128>}, {pipeline_mode = #tpu.pipeline_mode<synchronous>, transform_indices = @transform_2, window_bounds = array<i64: 3, 128>}, {pipeline_mode = #tpu.pipeline_mode<synchronous>, transform_indices = @transform_3, window_bounds = array<i64: 128, 128>}, {pipeline_mode = #tpu.pipeline_mode<synchronous>, transform_indices = @transform_4, window_bounds = array<i64: 1, 128>}, {transform_indices = @transform_5, window_bounds = array<i64: 8, 128>}]} {
    %c0 = arith.constant 0 : index
    %c0_0 = arith.constant 0 : index
    %0 = vector.load %arg2[%c0, %c0_0] : memref<32x128xbf16, #tpu.memory_space<vmem>>, vector<32x128xbf16>
    %c0_1 = arith.constant 0 : index
    %c0_2 = arith.constant 0 : index
    %1 = vector.load %arg4[%c0_1, %c0_2] : memref<128x128xbf16, #tpu.memory_space<vmem>>, vector<128x128xbf16>
    %c0_3 = arith.constant 0 : index
    %c0_4 = arith.constant 0 : index
    %2 = vector.load %arg3[%c0_3, %c0_4] : memref<3x128xf32, #tpu.memory_space<vmem>>, vector<3x128xf32>
    %3 = vector.extract_strided_slice %2 {offsets = [0, 0], sizes = [1, 128], strides = [1, 1]} : vector<3x128xf32> to vector<1x128xf32>
    %4 = vector.extract_strided_slice %2 {offsets = [1, 0], sizes = [1, 128], strides = [1, 1]} : vector<3x128xf32> to vector<1x128xf32>
    %5 = vector.extract_strided_slice %2 {offsets = [2, 0], sizes = [1, 128], strides = [1, 1]} : vector<3x128xf32> to vector<1x128xf32>
    %c0_5 = arith.constant 0 : index
    %c0_6 = arith.constant 0 : index
    %6 = vector.load %arg5[%c0_5, %c0_6] : memref<1x128xf32, #tpu.memory_space<vmem>>, vector<1x128xf32>
    %7 = tpu.iota {dimensions = array<i32: 1>} : vector<1x128xi32>
    %c64_i32 = arith.constant 64 : i32
    %8 = vector.broadcast %c64_i32 : i32 to vector<1x128xi32>
    %9 = arith.cmpi slt, %7, %8 : vector<1x128xi32>
    %c0_7 = arith.constant 0 : index
    %c0_8 = arith.constant 0 : index
    %10 = vector.load %arg1[%c0_7, %c0_8] : memref<8x32xf32, #tpu.memory_space<vmem>>, vector<8x32xf32>
    %11 = arith.truncf %10 : vector<8x32xf32> to vector<8x32xbf16>
    %cst = arith.constant dense<0.000000e+00> : vector<8x128xf32>
    %12 = tpu.matmul %11, %0, %cst {dimension_numbers = #tpu.dot_dimension_numbers<[1], [0], [0], [1], [0, 0, 1, 1], [], []>} : vector<8x32xbf16>, vector<32x128xbf16>, vector<8x128xf32> -> vector<8x128xf32>
    %13 = vector.broadcast %3 : vector<1x128xf32> to vector<8x128xf32>
    %14 = arith.addf %12, %13 : vector<8x128xf32>
    %cst_9 = arith.constant 0.000000e+00 : f32
    %15 = vector.broadcast %cst_9 : f32 to vector<8x128xf32>
    %16 = arith.maximumf %14, %15 : vector<8x128xf32>
    %cst_10 = arith.constant dense<0.000000e+00> : vector<8xf32>
    %17 = vector.multi_reduction <add>, %16, %cst_10 [1] : vector<8x128xf32> to vector<8xf32>
    %18 = vector.shape_cast %17 : vector<8xf32> to vector<8x1xf32>
    %cst_11 = arith.constant 1.562500e-02 : f32
    %19 = vector.broadcast %cst_11 : f32 to vector<8x1xf32>
    %20 = arith.mulf %18, %19 : vector<8x1xf32>
    %21 = vector.broadcast %20 : vector<8x1xf32> to vector<8x128xf32>
    %22 = arith.subf %16, %21 : vector<8x128xf32>
    %cst_12 = arith.constant 0.000000e+00 : f32
    %23 = vector.shape_cast %9 : vector<1x128xi1> to vector<1x128xi1>
    %24 = vector.broadcast %23 : vector<1x128xi1> to vector<8x128xi1>
    %25 = vector.broadcast %cst_12 : f32 to vector<8x128xf32>
    %26 = arith.select %24, %22, %25 : vector<8x128xi1>, vector<8x128xf32>
    %27 = arith.mulf %26, %26 : vector<8x128xf32>
    %cst_13 = arith.constant dense<0.000000e+00> : vector<8xf32>
    %28 = vector.multi_reduction <add>, %27, %cst_13 [1] : vector<8x128xf32> to vector<8xf32>
    %29 = vector.shape_cast %28 : vector<8xf32> to vector<8x1xf32>
    %cst_14 = arith.constant 1.562500e-02 : f32
    %30 = vector.broadcast %cst_14 : f32 to vector<8x1xf32>
    %31 = arith.mulf %29, %30 : vector<8x1xf32>
    %cst_15 = arith.constant 9.99999974E-6 : f32
    %32 = vector.broadcast %cst_15 : f32 to vector<8x1xf32>
    %33 = arith.addf %31, %32 : vector<8x1xf32>
    %34 = math.rsqrt %33 : vector<8x1xf32>
    %35 = vector.broadcast %34 : vector<8x1xf32> to vector<8x128xf32>
    %36 = arith.mulf %26, %35 : vector<8x128xf32>
    %37 = vector.broadcast %4 : vector<1x128xf32> to vector<8x128xf32>
    %38 = arith.mulf %36, %37 : vector<8x128xf32>
    %39 = vector.broadcast %5 : vector<1x128xf32> to vector<8x128xf32>
    %40 = arith.addf %38, %39 : vector<8x128xf32>
    %41 = arith.truncf %40 : vector<8x128xf32> to vector<8x128xbf16>
    %cst_16 = arith.constant dense<0.000000e+00> : vector<8x128xf32>
    %42 = tpu.matmul %41, %1, %cst_16 {dimension_numbers = #tpu.dot_dimension_numbers<[1], [0], [0], [1], [0, 0, 1, 1], [], []>} : vector<8x128xbf16>, vector<128x128xbf16>, vector<8x128xf32> -> vector<8x128xf32>
    %43 = vector.broadcast %6 : vector<1x128xf32> to vector<8x128xf32>
    %44 = arith.addf %42, %43 : vector<8x128xf32>
    %cst_17 = arith.constant 0.000000e+00 : f32
    %45 = vector.broadcast %cst_17 : f32 to vector<8x128xf32>
    %46 = arith.maximumf %44, %45 : vector<8x128xf32>
    %c0_18 = arith.constant 0 : index
    %c0_19 = arith.constant 0 : index
    %47 = vector.load %arg6[%c0_18, %c0_19] : memref<8x128xf32, #tpu.memory_space<vmem>>, vector<8x128xf32>
    tpu.vector_store %arg6[%c0_18, %c0_19], %46 {strides = array<i32>} : memref<8x128xf32, #tpu.memory_space<vmem>>, vector<8x128xf32>,
    return
  }
  func.func @transform_0(%arg0: i32) -> (i32, i32) {
    %c0_i32 = arith.constant 0 : i32
    %c0_i32_0 = arith.constant 0 : i32
    return %arg0, %c0_i32 : i32, i32
  }
  func.func @transform_1(%arg0: i32) -> (i32, i32) {
    %c0_i32 = arith.constant 0 : i32
    %c0_i32_0 = arith.constant 0 : i32
    %c0_i32_1 = arith.constant 0 : i32
    return %c0_i32, %c0_i32_0 : i32, i32
  }
  func.func @transform_2(%arg0: i32) -> (i32, i32) {
    %c0_i32 = arith.constant 0 : i32
    %c0_i32_0 = arith.constant 0 : i32
    %c0_i32_1 = arith.constant 0 : i32
    return %c0_i32, %c0_i32_0 : i32, i32
  }
  func.func @transform_3(%arg0: i32) -> (i32, i32) {
    %c0_i32 = arith.constant 0 : i32
    %c0_i32_0 = arith.constant 0 : i32
    %c0_i32_1 = arith.constant 0 : i32
    return %c0_i32, %c0_i32_0 : i32, i32
  }
  func.func @transform_4(%arg0: i32) -> (i32, i32) {
    %c0_i32 = arith.constant 0 : i32
    %c0_i32_0 = arith.constant 0 : i32
    %c0_i32_1 = arith.constant 0 : i32
    return %c0_i32, %c0_i32_0 : i32, i32
  }
  func.func @transform_5(%arg0: i32) -> (i32, i32) {
    %c0_i32 = arith.constant 0 : i32
    %c0_i32_0 = arith.constant 0 : i32
    return %arg0, %c0_i32 : i32, i32
  }
}

</mosaic_0001>

<llo_original>
// kernel: tpu_custom_call.1
$region0: #{tpu_custom_call.1}
  #allocation0 [shape = 'u32[]', space=smem, size = 0x4, offset = 0x4, fixed_abs, tag = 'smem constant byte address 0x4 - core index']
  #allocation1 [shape = 'u32[144,128]{1,0:T(1,128)}', space=vmem, size = 0x12000, scoped, tag = 'internal scratch']
  %s0 = inlined_call_operand.hbm [shape: f32[16,32], index: 0, kind: input, shape index: {}]
  %s1 = inlined_call_operand.hbm [shape: bf16[32,128], index: 1, kind: input, shape index: {}]
  %s2 = inlined_call_operand.hbm [shape: f32[3,128], index: 2, kind: input, shape index: {}]
  %s3 = inlined_call_operand.hbm [shape: bf16[128,128], index: 3, kind: input, shape index: {}]
  %s4 = inlined_call_operand.vmem [shape: f32[1,128], index: 4, kind: input, shape index: {}]
  %s5 = inlined_call_operand.hbm [shape: f32[16,128], index: 5, kind: output, shape index: {}]
  %s6 = sld [smem:[#allocation0]]
  $region69: #{tpu_custom_call.1} parent=0
    _
  %s8 = ssub.s32 1, %s6
  %s9 = scalar_select 0, %s8, %s6
  $region1: #{tpu_custom_call.1} parent=0
    #allocation2 [shape = 'u8[8192]{0}', space=vmem, size = 0x2000, scoped, tag = 'input window, operand 0']
    #allocation3 [shape = 's32[2]{0}', space=sflag, size = 0x8, scoped, tag = 'scoped memory for tpu_custom_call.1']
    #allocation4 [shape = 's32[2]{0}', space=sflag, size = 0x8, scoped, tag = 'scoped memory for tpu_custom_call.1']
    #allocation5 [shape = 'u8[8192]{0}', space=vmem, size = 0x2000, scoped, tag = 'input window, operand 1, single buffered']
    #allocation6 [shape = 's32[1]{0}', space=sflag, size = 0x4, scoped, tag = 'scoped memory for tpu_custom_call.1']
    #allocation7 [shape = 'u8[2048]{0}', space=vmem, size = 0x800, scoped, tag = 'input window, operand 2, single buffered']
    #allocation8 [shape = 'u8[32768]{0}', space=vmem, size = 0x8000, scoped, tag = 'input window, operand 3, single buffered']
    #allocation9 [shape = 's32[1]{0}', space=sflag, size = 0x4, scoped, tag = 'scoped memory for tpu_custom_call.1']
    #allocation10 [shape = 'u8[8192]{0}', space=vmem, size = 0x2000, scoped, tag = 'output window, operand 0']
    %10 = vsyncpa [#allocation3], 0
    %s11 = scalar_lea.sflag [#allocation3], 1
    %12 = vsyncpa %s11, 0
    %13 = vsyncpa [#allocation6], 0
    %14 = vsyncpa [#allocation9], 0
    %15 = vsyncpa [#allocation4], 0
    %s16 = scalar_lea.sflag [#allocation4], 1
    %17 = vsyncpa %s16, 0
    loop: start=0, step=1, limit=4
    $region2: #{tpu_custom_call.1} parent=1 // loop_pre_header
      _
    $region3: #{tpu_custom_call.1} parent=1 // loop_header
      %s19 = sphi 0, %s23
      %p20 = scmp.ge.s32.totalorder %s19, 4
      %s29 = sphi 0, %s31
      %s32 = sphi 0, %s29
      %s33 = sphi 0, %s32
      %s49 = sphi 0, %s33
      %s53 = sphi 0, %s53
      %s55 = sphi 0, %s53
      %s56 = sphi 0, %s55
      %s70 = sphi 0, %s56
      %s74 = sphi 0, %s74
      %s76 = sphi 0, %s74
      %s77 = sphi 0, %s76
      %s91 = sphi 0, %s77
      %s95 = sphi 0, %s95
      %s97 = sphi 0, %s95
      %s98 = sphi 0, %s97
      %s112 = sphi 0, %s98
      %s116 = sphi 0, %s116
      %s118 = sphi 0, %s116
      %s119 = sphi 0, %s118
      %s133 = sphi 0, %s119
      %s139 = sphi 0, %s141
      %s142 = sphi 0, %s139
      %s143 = sphi 0, %s142
      %s159 = sphi 0, %s143
    $region4: #{tpu_custom_call.1} parent=1 // loop_header_branch
      %22 = sbr.rel (%p20) target = $region8
    $region5: #{tpu_custom_call.1} parent=1 // loop_body
      %s24 = ssub.s32 %s19, 1
      %s25 = ssub.s32 %s19, 2
      %s26 = sadd.s32 %s19, 1
      %s27 = ssub.s32 %s19, %s26
      %p28 = scmp.eq.s32.totalorder %s27, 0
      %s30 = sadd.s32 %s29, 1
      %s31 = scalar_select %p28, %s29, %s30
      %p34 = pneg %p28
      %p35 = scmp.eq.s32.totalorder %s19, 1
      %p36 = por %p34, %p35
      %p37 = scmp.ne.s32.totalorder %s29, %s32
      %p38 = scmp.eq.s32.totalorder %s19, 0
      %p39 = por %p37, %p38
      %p40 = scmp.ne.s32.totalorder %s29, %s32
      %p41 = scmp.eq.s32.totalorder %s24, 1
      %p42 = por %p40, %p41
      %p43 = scmp.ne.s32.totalorder %s32, %s33
      %p44 = scmp.eq.s32.totalorder %s24, 0
      %p45 = por %p43, %p44
      %p46 = scmp.ne.s32.totalorder %s32, %s33
      %p47 = scmp.eq.s32.totalorder %s25, 1
      %p48 = por %p46, %p47
      %p50 = scmp.ne.s32.totalorder %s33, %s49
      %p51 = scmp.eq.s32.totalorder %s25, 0
      %p52 = por %p50, %p51
      %s54 = sadd.s32 %s53, 1
      %p57 = scmp.eq.s32.totalorder %s19, 1
      %p58 = scmp.ne.s32.totalorder %s53, %s55
      %p59 = scmp.eq.s32.totalorder %s19, 0
      %p60 = por %p58, %p59
      %p61 = scmp.ne.s32.totalorder %s53, %s55
      %p62 = scmp.eq.s32.totalorder %s24, 1
      %p63 = por %p61, %p62
      %p64 = scmp.ne.s32.totalorder %s55, %s56
      %p65 = scmp.eq.s32.totalorder %s24, 0
      %p66 = por %p64, %p65
      %p67 = scmp.ne.s32.totalorder %s55, %s56
      %p68 = scmp.eq.s32.totalorder %s25, 1
      %p69 = por %p67, %p68
      %p71 = scmp.ne.s32.totalorder %s56, %s70
      %p72 = scmp.eq.s32.totalorder %s25, 0
      %p73 = por %p71, %p72
      %s75 = sadd.s32 %s74, 1
      %p78 = scmp.eq.s32.totalorder %s19, 1
      %p79 = scmp.ne.s32.totalorder %s74, %s76
      %p80 = scmp.eq.s32.totalorder %s19, 0
      %p81 = por %p79, %p80
      %p82 = scmp.ne.s32.totalorder %s74, %s76
      %p83 = scmp.eq.s32.totalorder %s24, 1
      %p84 = por %p82, %p83
      %p85 = scmp.ne.s32.totalorder %s76, %s77
      %p86 = scmp.eq.s32.totalorder %s24, 0
      %p87 = por %p85, %p86
      %p88 = scmp.ne.s32.totalorder %s76, %s77
      %p89 = scmp.eq.s32.totalorder %s25, 1
      %p90 = por %p88, %p89
      %p92 = scmp.ne.s32.totalorder %s77, %s91
      %p93 = scmp.eq.s32.totalorder %s25, 0
      %p94 = por %p92, %p93
      %s96 = sadd.s32 %s95, 1
      %p99 = scmp.eq.s32.totalorder %s19, 1
      %p100 = scmp.ne.s32.totalorder %s95, %s97
      %p101 = scmp.eq.s32.totalorder %s19, 0
      %p102 = por %p100, %p101
      %p103 = scmp.ne.s32.totalorder %s95, %s97
      %p104 = scmp.eq.s32.totalorder %s24, 1
      %p105 = por %p103, %p104
      %p106 = scmp.ne.s32.totalorder %s97, %s98
      %p107 = scmp.eq.s32.totalorder %s24, 0
      %p108 = por %p106, %p107
      %p109 = scmp.ne.s32.totalorder %s97, %s98
      %p110 = scmp.eq.s32.totalorder %s25, 1
      %p111 = por %p109, %p110
      %p113 = scmp.ne.s32.totalorder %s98, %s112
      %p114 = scmp.eq.s32.totalorder %s25, 0
      %p115 = por %p113, %p114
      %s117 = sadd.s32 %s116, 1
      %p120 = scmp.eq.s32.totalorder %s19, 1
      %p121 = scmp.ne.s32.totalorder %s116, %s118
      %p122 = scmp.eq.s32.totalorder %s19, 0
      %p123 = por %p121, %p122
      %p124 = scmp.ne.s32.totalorder %s116, %s118
      %p125 = scmp.eq.s32.totalorder %s24, 1
      %p126 = por %p124, %p125
      %p127 = scmp.ne.s32.totalorder %s118, %s119
      %p128 = scmp.eq.s32.totalorder %s24, 0
      %p129 = por %p127, %p128
      %p130 = scmp.ne.s32.totalorder %s118, %s119
      %p131 = scmp.eq.s32.totalorder %s25, 1
      %p132 = por %p130, %p131
      %p134 = scmp.ne.s32.totalorder %s119, %s133
      %p135 = scmp.eq.s32.totalorder %s25, 0
      %p136 = por %p134, %p135
      %s137 = ssub.s32 %s19, %s26
      %p138 = scmp.eq.s32.totalorder %s137, 0
      %s140 = sadd.s32 %s139, 1
      %s141 = scalar_select %p138, %s139, %s140
      %p144 = pneg %p138
      %p145 = scmp.eq.s32.totalorder %s19, 1
      %p146 = por %p144, %p145
      %p147 = scmp.ne.s32.totalorder %s139, %s142
      %p148 = scmp.eq.s32.totalorder %s19, 0
      %p149 = por %p147, %p148
      %p150 = scmp.ne.s32.totalorder %s139, %s142
      %p151 = scmp.eq.s32.totalorder %s24, 1
      %p152 = por %p150, %p151
      %p153 = scmp.ne.s32.totalorder %s142, %s143
      %p154 = scmp.eq.s32.totalorder %s24, 0
      %p155 = por %p153, %p154
      %p156 = scmp.ne.s32.totalorder %s142, %s143
      %p157 = scmp.eq.s32.totalorder %s25, 1
      %p158 = por %p156, %p157
      %p160 = scmp.ne.s32.totalorder %s143, %s159
      %p161 = scmp.eq.s32.totalorder %s25, 0
      %p162 = por %p160, %p161
      %p163 = scmp.le.s32.totalorder 1, %s19
      %p164 = scmp.lt.s32.totalorder %s19, 3
      %p165 = pnand %p163, %p164
      %p166 = pneg %p165
      // Predicated region
      $region9: #{tpu_custom_call.1} parent=5 // pred_check
        _
      $region10: #{tpu_custom_call.1} parent=5 // pred_check_branch
        %168 = sbr.rel (%p165) target = $region12
      $region11: #{tpu_custom_call.1} parent=5 // pred_region
        %s169 = ssub.s32 %s19, 1
        // Predicated region
        $region13: #{tpu_custom_call.1} parent=11 // pred_check
          %p170 = pneg %p66
        $region14: #{tpu_custom_call.1} parent=11 // pred_check_branch
          %172 = sbr.rel (%p170) target = $region16
        $region15: #{tpu_custom_call.1} parent=11 // pred_region
          %s174 = ssub.s32 256, 256
          %175 = vsyncadd [#allocation6], %s174
          %s176 = sshll.u32 [#allocation5], 4
          %s177 = int_to_ptr.vmem [resolvable:$true] %s176
          %182 = dma.hbm_to_vmem [thread:$0]  %s1, 256, %s177, [#allocation6], 64, 64, 4
        $region16: #{tpu_custom_call.1} parent=11 // pred_fallthru
          _
        // Predicated region
        $region17: #{tpu_custom_call.1} parent=11 // pred_check
          %p183 = pneg %p87
        $region18: #{tpu_custom_call.1} parent=11 // pred_check_branch
          %185 = sbr.rel (%p183) target = $region20
        $region19: #{tpu_custom_call.1} parent=11 // pred_region
          %s187 = ssub.s32 64, 64
          %188 = vsyncadd [#allocation6], %s187
          %s190 = sshll.u32 [#allocation7], 4
          %s191 = int_to_ptr.vmem [resolvable:$true] %s190
          %193 = dma.hbm_to_vmem [thread:$0]  %s2, 64, %s191, [#allocation6]
        $region20: #{tpu_custom_call.1} parent=11 // pred_fallthru
          _
        // Predicated region
        $region21: #{tpu_custom_call.1} parent=11 // pred_check
          %p194 = pneg %p108
        $region22: #{tpu_custom_call.1} parent=11 // pred_check_branch
          %196 = sbr.rel (%p194) target = $region24
        $region23: #{tpu_custom_call.1} parent=11 // pred_region
          %s198 = ssub.s32 1024, 1024
          %199 = vsyncadd [#allocation9], %s198
          %s200 = sshll.u32 [#allocation8], 4
          %s201 = int_to_ptr.vmem [resolvable:$true] %s200
          %206 = dma.hbm_to_vmem [thread:$0]  %s3, 1024, %s201, [#allocation9], 64, 64, 4
        $region24: #{tpu_custom_call.1} parent=11 // pred_fallthru
          _
        // Predicated region
        $region25: #{tpu_custom_call.1} parent=11 // pred_check
          %p207 = pneg %p129
        $region26: #{tpu_custom_call.1} parent=11 // pred_check_branch
          %209 = sbr.rel (%p207) target = $region28
        $region27: #{tpu_custom_call.1} parent=11 // pred_region
          _
        $region28: #{tpu_custom_call.1} parent=11 // pred_fallthru
          _
      $region12: #{tpu_custom_call.1} parent=5 // pred_fallthru
        _
      %p210 = scmp.lt.s32.totalorder %s19, 2
      // Predicated region
      $region29: #{tpu_custom_call.1} parent=5 // pred_check
        %p211 = pneg %p210
      $region30: #{tpu_custom_call.1} parent=5 // pred_check_branch
        %213 = sbr.rel (%p211) target = $region32
      $region31: #{tpu_custom_call.1} parent=5 // pred_region
        // Predicated region
        $region33: #{tpu_custom_call.1} parent=31 // pred_check
          %p214 = pneg %p39
        $region34: #{tpu_custom_call.1} parent=31 // pred_check_branch
          %216 = sbr.rel (%p214) target = $region36
        $region35: #{tpu_custom_call.1} parent=31 // pred_region
          %s217 = sand.u32 %s29, 1
          %s218 = scalar_lea.sflag [#allocation3], %s217
          %s219 = sand.u32 %s29, 1
          %s220 = smul.addr %s219, 8
          %s221 = scalar_lea.vmem [#allocation2], %s220
          %s223 = ssub.s32 128, 128
          %224 = vsyncadd %s218, %s223
          %s225 = smul.addr %s19, 128
          %s226 = scalar_lea.hbm %s0, %s225
          %s228 = sshll.u32 %s221, 4
          %s229 = int_to_ptr.vmem [resolvable:$true] %s228
          %231 = dma.hbm_to_vmem [thread:$0]  %s226, 128, %s229, %s218
        $region36: #{tpu_custom_call.1} parent=31 // pred_fallthru
          _
      $region32: #{tpu_custom_call.1} parent=5 // pred_fallthru
        _
      %p232 = scmp.le.s32.totalorder 1, %s19
      %p233 = scmp.lt.s32.totalorder %s19, 3
      %p234 = pnand %p232, %p233
      %p235 = pneg %p234
      // Predicated region
      $region37: #{tpu_custom_call.1} parent=5 // pred_check
        _
      $region38: #{tpu_custom_call.1} parent=5 // pred_check_branch
        %237 = sbr.rel (%p234) target = $region40
      $region39: #{tpu_custom_call.1} parent=5 // pred_region
        %s238 = ssub.s32 %s19, 1
        %s239 = sand.u32 %s32, 1
        %s240 = scalar_lea.sflag [#allocation3], %s239
        %s241 = sand.u32 %s32, 1
        %s242 = smul.addr %s241, 8
        %s243 = scalar_lea.vmem [#allocation2], %s242
        // Predicated region
        $region41: #{tpu_custom_call.1} parent=39 // pred_check
          %p244 = pneg %p45
        $region42: #{tpu_custom_call.1} parent=39 // pred_check_branch
          %246 = sbr.rel (%p244) target = $region44
        $region43: #{tpu_custom_call.1} parent=39 // pred_region
          %247 = dma.done %s240, 128
        $region44: #{tpu_custom_call.1} parent=39 // pred_fallthru
          _
        // Predicated region
        $region45: #{tpu_custom_call.1} parent=39 // pred_check
          %p248 = pneg %p66
        $region46: #{tpu_custom_call.1} parent=39 // pred_check_branch
          %250 = sbr.rel (%p248) target = $region48
        $region47: #{tpu_custom_call.1} parent=39 // pred_region
          %251 = dma.done [#allocation6], 256
        $region48: #{tpu_custom_call.1} parent=39 // pred_fallthru
          _
        // Predicated region
        $region49: #{tpu_custom_call.1} parent=39 // pred_check
          %p252 = pneg %p87
        $region50: #{tpu_custom_call.1} parent=39 // pred_check_branch
          %254 = sbr.rel (%p252) target = $region52
        $region51: #{tpu_custom_call.1} parent=39 // pred_region
          %255 = dma.done [#allocation6], 64
        $region52: #{tpu_custom_call.1} parent=39 // pred_fallthru
          _
        // Predicated region
        $region53: #{tpu_custom_call.1} parent=39 // pred_check
          %p256 = pneg %p108
        $region54: #{tpu_custom_call.1} parent=39 // pred_check_branch
          %258 = sbr.rel (%p256) target = $region56
        $region55: #{tpu_custom_call.1} parent=39 // pred_region
          %259 = dma.done [#allocation9], 1024
        $region56: #{tpu_custom_call.1} parent=39 // pred_fallthru
          _
        %s260 = sand.u32 %s32, 1
        %s261 = scalar_lea.sflag [#allocation3], %s260
        %s262 = sand.u32 %s32, 1
        %s263 = smul.addr %s262, 8
        %s264 = scalar_lea.vmem [#allocation2], %s263
        %p265 = pneg %p45
        %p266 = pneg %p42
        %p267 = pneg %p66
        %p268 = pneg %p63
        %p269 = pneg %p87
        %p270 = pneg %p84
        %p271 = pneg %p108
        %p272 = pneg %p105
        %p273 = pneg %p129
        %p274 = pneg %p126
        %p275 = pneg %p155
        %p276 = pneg %p152
        %s277 = sand.u32 %s142, 1
        %s278 = scalar_lea.sflag [#allocation4], %s277
        %s279 = sand.u32 %s142, 1
        %s280 = smul.addr %s279, 8
        %s281 = scalar_lea.vmem [#allocation10], %s280
        %v283 = vld [vmem:[#allocation5] sm:$0xf]
        %v284 = vld [vmem:[#allocation5 + $0x4] sm:$0xf]
        %v285 = vld [vmem:[#allocation5 + $0x8] sm:$0xf]
        %v286 = vld [vmem:[#allocation5 + $0xc] sm:$0xf]
        %v287 = vld [vmem:[#allocation8] sm:$0xf]
        %v288 = vld [vmem:[#allocation8 + $0x4] sm:$0xf]
        %v289 = vld [vmem:[#allocation8 + $0x8] sm:$0xf]
        %v290 = vld [vmem:[#allocation8 + $0xc] sm:$0xf]
        %v291 = vld [vmem:[#allocation8 + $0x10] sm:$0xf]
        %v292 = vld [vmem:[#allocation8 + $0x14] sm:$0xf]
        %v293 = vld [vmem:[#allocation8 + $0x18] sm:$0xf]
        %v294 = vld [vmem:[#allocation8 + $0x1c] sm:$0xf]
        %v295 = vld [vmem:[#allocation8 + $0x20] sm:$0xf]
        %v296 = vld [vmem:[#allocation8 + $0x24] sm:$0xf]
        %v297 = vld [vmem:[#allocation8 + $0x28] sm:$0xf]
        %v298 = vld [vmem:[#allocation8 + $0x2c] sm:$0xf]
        %v299 = vld [vmem:[#allocation8 + $0x30] sm:$0xf]
        %v300 = vld [vmem:[#allocation8 + $0x34] sm:$0xf]
        %v301 = vld [vmem:[#allocation8 + $0x38] sm:$0xf]
        %v302 = vld [vmem:[#allocation8 + $0x3c] sm:$0xf]
        %v303 = vld [vmem:[#allocation7] sm:$0x7]
        %v304 = vld [vmem:[%s4] sm:$0x1]
        %v305 = vlaneseq
        %v306 = vand.u32 %v305, 127
        %vm307 = vcmp.lt.s32.totalorder %v306, 64
        %v308 = vld [vmem:[%s243] sm:$0xff]
        %v309 = vpack.c.bf16 %v308, %v308
        %v310 = vlaneseq
        %v311 = vshrl.u32 %v310, 7
        %v312 = vsub.s32 0, %v311
        %v313 = vrot.slane %v303, %v312
        %v318 = vunpack.c.l.b16 %v283
        %v319 = vunpack.c.l.b16 %v284
        %v320 = vunpack.c.l.b16 %v285
        %v321 = vunpack.c.l.b16 %v286
        %v322 = vpack.c.b16 %v319, %v318
        %v323 = vpack.c.b16 %v321, %v320
        %vm326 = vcmask 261120
        %v328 = vsel %vm326, %v309, 0
        %330 = vmatprep.subr.bf16.mxu0 0
        %331 = vmatpush1.bf16.msra.mxu0 0
        %332 = vmatprep.subr.bf16.mxu0 0
        %333 = vmatpush1.bf16.msra.mxu0 0
        %334 = vmatprep.subr.bf16.mxu0 0
        %335 = vmatpush1.bf16.msra.mxu0 0
        %336 = vmatprep.subr.bf16.mxu0 0
        %337 = vmatpush1.bf16.msra.mxu0 0
        %338 = vmatprep.subr.bf16.mxu0 0
        %339 = vmatpush1.bf16.msra.mxu0 0
        %340 = vmatprep.subr.bf16.mxu0 0
        %341 = vmatpush1.bf16.msra.mxu0 0
        %342 = vmatprep.subr.bf16.mxu0 0
        %343 = vmatpush1.bf16.msra.mxu0 %v323
        %344 = vmatprep.subr.bf16.mxu0 0
        %345 = vmatpush1.bf16.msra.mxu0 %v322
        %346 = vmatprep.subr.bf16.mxu0 0
        %347 = vmatpush2.bf16.msra.mxu0 0
        %348 = vmatprep.subr.bf16.mxu0 0
        %349 = vmatpush2.bf16.msra.mxu0 0
        %350 = vmatprep.subr.bf16.mxu0 0
        %351 = vmatpush2.bf16.msra.mxu0 0
        %352 = vmatprep.subr.bf16.mxu0 0
        %353 = vmatpush2.bf16.msra.mxu0 0
        %354 = vmatprep.subr.bf16.mxu0 0
        %355 = vmatpush2.bf16.msra.mxu0 0
        %356 = vmatprep.subr.bf16.mxu0 0
        %357 = vmatpush2.bf16.msra.mxu0 0
        %358 = vmatprep.subr.bf16.mxu0 0
        %359 = vmatpush2.bf16.msra.mxu0 0
        %360 = vmatprep.subr.bf16.mxu0 0
        %361 = vmatpush2.bf16.msra.mxu0 0
        %362 = vmatprep.mubr.bf16.mxu0 0
        %363 = vmatmul.mubr.bf16.gmra.mxu0 %v328
        %v364 = vpop.f32.mrf.mxu0
        %v365 = vadd.f32 %v313, %v364
        %v366 = vpop.f32.mrf.mxu0
        %v367 = vpop.f32.mrf.mxu0
        %v368 = vpop.f32.mrf.mxu0
        %369 = vdwg.mxu0
        %v370 = vmax.f32 %v365, 0.0
        %371 = vadd.xlane.f32.xlu0 %v370
        %v372 = vpop.xlane.xlu0 %371
        %v373 = vmul.f32 %v372, 0.015625
        %v374 = vsub.f32 %v370, %v373
        %v375 = vsel %vm307, 1, 0
        %vm376 = vcmp.eq.s32.totalorder %v375, 1
        %v377 = vsel %vm376, %v374, 0.0
        %v378 = vmul.f32 %v377, %v377
        %379 = vadd.xlane.f32.xlu0 %v378
        %v380 = vpop.xlane.xlu0 %379
        %v381 = vmul.f32 %v380, 0.015625
        %v382 = vadd.f32 %v381, 1e-05
        %v383 = vrsqrt.pop %v382
        %v384 = vmul.f32 %v377, %v383
        %v385 = vlaneseq
        %v386 = vshrl.u32 %v385, 7
        %v387 = vsub.s32 1, %v386
        %v388 = vrot.slane %v303, %v387
        %v389 = vmul.f32 %v384, %v388
        %v390 = vlaneseq
        %v391 = vshrl.u32 %v390, 7
        %v392 = vsub.s32 2, %v391
        %v393 = vrot.slane %v303, %v392
        %v394 = vadd.f32 %v389, %v393
        %v395 = vpack.c.bf16 %v394, %v394
        %v397 = vlaneseq
        %v398 = vshrl.u32 %v397, 7
        %v399 = vsub.s32 0, %v398
        %v400 = vrot.slane %v304, %v399
        %v418 = vunpack.c.l.b16 %v287
        %v419 = vunpack.c.l.b16 %v288
        %v420 = vunpack.c.l.b16 %v289
        %v421 = vunpack.c.l.b16 %v290
        %v422 = vunpack.c.l.b16 %v291
        %v423 = vunpack.c.l.b16 %v292
        %v424 = vunpack.c.l.b16 %v293
        %v425 = vunpack.c.l.b16 %v294
        %v426 = vunpack.c.l.b16 %v295
        %v427 = vunpack.c.l.b16 %v296
        %v428 = vunpack.c.l.b16 %v297
        %v429 = vunpack.c.l.b16 %v298
        %v430 = vunpack.c.l.b16 %v299
        %v431 = vunpack.c.l.b16 %v300
        %v432 = vunpack.c.l.b16 %v301
        %v433 = vunpack.c.l.b16 %v302
        %v434 = vpack.c.b16 %v419, %v418
        %v435 = vpack.c.b16 %v421, %v420
        %v436 = vpack.c.b16 %v423, %v422
        %v437 = vpack.c.b16 %v425, %v424
        %v438 = vpack.c.b16 %v427, %v426
        %v439 = vpack.c.b16 %v429, %v428
        %v440 = vpack.c.b16 %v431, %v430
        %v441 = vpack.c.b16 %v433, %v432
        %450 = vmatprep.subr.bf16.mxu0 0
        %451 = vmatpush1.bf16.msra.mxu0 %v441
        %452 = vmatprep.subr.bf16.mxu0 0
        %453 = vmatpush1.bf16.msra.mxu0 %v440
        %454 = vmatprep.subr.bf16.mxu0 0
        %455 = vmatpush1.bf16.msra.mxu0 %v439
        %456 = vmatprep.subr.bf16.mxu0 0
        %457 = vmatpush1.bf16.msra.mxu0 %v438
        %458 = vmatprep.subr.bf16.mxu0 0
        %459 = vmatpush1.bf16.msra.mxu0 %v437
        %460 = vmatprep.subr.bf16.mxu0 0
        %461 = vmatpush1.bf16.msra.mxu0 %v436
        %462 = vmatprep.subr.bf16.mxu0 0
        %463 = vmatpush1.bf16.msra.mxu0 %v435
        %464 = vmatprep.subr.bf16.mxu0 0
        %465 = vmatpush1.bf16.msra.mxu0 %v434
        %466 = vmatprep.subr.bf16.mxu0 0
        %467 = vmatpush2.bf16.msra.mxu0 0
        %468 = vmatprep.subr.bf16.mxu0 0
        %469 = vmatpush2.bf16.msra.mxu0 0
        %470 = vmatprep.subr.bf16.mxu0 0
        %471 = vmatpush2.bf16.msra.mxu0 0
        %472 = vmatprep.subr.bf16.mxu0 0
        %473 = vmatpush2.bf16.msra.mxu0 0
        %474 = vmatprep.subr.bf16.mxu0 0
        %475 = vmatpush2.bf16.msra.mxu0 0
        %476 = vmatprep.subr.bf16.mxu0 0
        %477 = vmatpush2.bf16.msra.mxu0 0
        %478 = vmatprep.subr.bf16.mxu0 0
        %479 = vmatpush2.bf16.msra.mxu0 0
        %480 = vmatprep.subr.bf16.mxu0 0
        %481 = vmatpush2.bf16.msra.mxu0 0
        %482 = vmatprep.mubr.bf16.mxu0 0
        %483 = vmatmul.mubr.bf16.gmra.mxu0 %v395
        %v484 = vpop.f32.mrf.mxu0
        %v485 = vadd.f32 %v400, %v484
        %v486 = vpop.f32.mrf.mxu0
        %v487 = vpop.f32.mrf.mxu0
        %v488 = vpop.f32.mrf.mxu0
        %489 = vdwg.mxu0
        %v490 = vmax.f32 %v485, 0.0
        %491 = vst [vmem:[%s281] sm:$0xff] %v490
        %s492 = sand.u32 %s142, 1
        %s493 = scalar_lea.sflag [#allocation4], %s492
        %s494 = sand.u32 %s142, 1
        %s495 = smul.addr %s494, 8
        %s496 = scalar_lea.vmem [#allocation10], %s495
        // Predicated region
        $region57: #{tpu_custom_call.1} parent=39 // pred_check
          %p497 = pneg %p152
        $region58: #{tpu_custom_call.1} parent=39 // pred_check_branch
          %499 = sbr.rel (%p497) target = $region60
        $region59: #{tpu_custom_call.1} parent=39 // pred_region
          %s501 = ssub.s32 128, 128
          %502 = vsyncadd %s493, %s501
          %s503 = smul.addr %s24, 128
          %s504 = scalar_lea.hbm %s5, %s503
          %s506 = sshll.u32 %s496, 4
          %s507 = int_to_ptr.vmem [resolvable:$true] %s506
          %509 = dma.vmem_to_hbm [thread:$0]  %s507, 128, %s504, %s493
        $region60: #{tpu_custom_call.1} parent=39 // pred_fallthru
          _
      $region40: #{tpu_custom_call.1} parent=5 // pred_fallthru
        _
      %p510 = scmp.le.s32.totalorder 2, %s19
      // Predicated region
      $region61: #{tpu_custom_call.1} parent=5 // pred_check
        %p511 = pneg %p510
      $region62: #{tpu_custom_call.1} parent=5 // pred_check_branch
        %513 = sbr.rel (%p511) target = $region64
      $region63: #{tpu_custom_call.1} parent=5 // pred_region
        %s514 = ssub.s32 %s19, 2
        // Predicated region
        $region65: #{tpu_custom_call.1} parent=63 // pred_check
          %p515 = pneg %p158
        $region66: #{tpu_custom_call.1} parent=63 // pred_check_branch
          %517 = sbr.rel (%p515) target = $region68
        $region67: #{tpu_custom_call.1} parent=63 // pred_region
          %s518 = sand.u32 %s143, 1
          %s519 = scalar_lea.sflag [#allocation4], %s518
          %s520 = sand.u32 %s143, 1
          %s521 = smul.addr %s520, 8
          %s522 = scalar_lea.vmem [#allocation10], %s521
          %523 = dma.done %s519, 128
        $region68: #{tpu_custom_call.1} parent=63 // pred_fallthru
          _
      $region64: #{tpu_custom_call.1} parent=5 // pred_fallthru
        _
    $region6: #{tpu_custom_call.1} parent=1 // loop_footer
      %s23 = sadd.s32 1, %s19
    $region7: #{tpu_custom_call.1} parent=1 // loop_footer_branch
      %18 = sbr.rel target = $region3
    $region8: #{tpu_custom_call.1} parent=1 // loop_exit
      _
    %524 = vsyncpa [#allocation3], 1
    %s525 = scalar_lea.sflag [#allocation3], 1
    %526 = vsyncpa %s525, 1
    %527 = vsyncpa [#allocation6], 1
    %528 = vsyncpa [#allocation9], 1
    %529 = vsyncpa [#allocation4], 1
    %s530 = scalar_lea.sflag [#allocation4], 1
    %531 = vsyncpa %s530, 1

</llo_original>
